<compile_context>
chip_gen: v7x
topology: tpu7x:2x2x1
jax: 0.10.0
libtpu: 0.0.40
codegen_flags: <defaults>
</compile_context>

<pallas_src>
import functools
import math

import jax
import jax.numpy as jnp
from jax.experimental import pallas as pl
from jax.experimental.pallas import tpu as pltpu


# ------------------------------ Pallas kernel -------------------------------

def _tube_kernel(x_ref, w1_ref, b1_ref, w2_ref, b2_ref, o_ref, *, q, exp_dtype):
    """Fused encoder -> hyperbolic mixing -> decoder on one (C, T) lane tile.

    x_ref : (1, C_in, T)  input tile
    w1_ref: (3q, C_in)    packed encoder weights: rows [0:q)=[theta;gamma],
                          [q:2q)=[u+v; u+v], [2q:3q)=[u-v; -(u-v)] (zero padded)
    b1_ref: (3q, 1)       packed encoder bias (f32)
    w2_ref: (C_out, q)    packed decoder weights: cols [0:h)=0.5*W2a,
                          [h:2h)=0.5*W2b, padded cols zero
    b2_ref: (C_out, 1)    decoder bias (f32)
    """
    w1 = w1_ref[...]
    x = x_ref[0]
    if x.dtype != w1.dtype:
        x = x.astype(w1.dtype)

    # Encoder (1x1 conv == channel matmul), f32 accumulation on the MXU.
    t = jnp.dot(w1, x, preferred_element_type=jnp.float32) + b1_ref[...]

    p = t[0 * q:1 * q]          # [theta; gamma]      (8-aligned static slices)
    s = t[1 * q:2 * q]          # [u+v ;  u+v ]
    d = t[2 * q:3 * q]          # [u-v ; -(u-v)]

    # Hyperbolic mixing.  With the packing above:
    #   rows [0:h)  : (u+v)e^theta + (u-v)e^-theta = 2*(u cosh + v sinh) = 2a
    #   rows [h:2h) : (u+v)e^gamma - (u-v)e^-gamma = 2*(u sinh + v cosh) = 2b
    # The 0.5 is folded into the decoder weights, so c feeds the decoder as-is.
    if exp_dtype is not None:   # bf16 EUP fast path (v6e/v7x)
        p = p.astype(exp_dtype)
    e = jnp.exp(p)
    einv = jnp.exp(-p)
    c = s * e + d * einv        # combine in f32

    w2 = w2_ref[...]
    if c.dtype != w2.dtype:
        c = c.astype(w2.dtype)
    y = jnp.dot(w2, c, preferred_element_type=jnp.float32) + b2_ref[...]
    o_ref[0] = y.astype(o_ref.dtype)


# --------------------------- tiling / wrapper --------------------------------

_VMEM_BUDGET_BYTES = 16 * 1024 * 1024   # per-lane working-set budget
_VMEM_LIMIT_BYTES = 32 * 1024 * 1024    # explicit scoped-VMEM limit: raises v5e's
                                        # 16 MiB default, == v6e/v7x scoped default,
                                        # well under v7x's 64 MiB physical VMEM.


def _pick_hw_tile(hw, n_batch, per_lane_bytes, vmem_budget_bytes, cap=32768):
    """Largest 128-multiple lane tile under the VMEM budget.

    No divisibility requirement: the grid uses cdiv and Pallas masks the
    ragged last block.  When n_batch == 1, keep >= 2 spatial tiles so both
    v7x TensorCores get work.
    """
    if hw <= 128:
        return hw                               # single full-extent block (legal)
    max_lanes = max(128, (vmem_budget_bytes // max(per_lane_bytes, 1)) // 128 * 128)
    t = min(cap, max_lanes, (hw // 128) * 128)
    if n_batch == 1:
        half = max(128, -(-((hw + 1) // 2) // 128) * 128)
        t = min(t, half)
    return t


def hyptube_forward(x, ht):
    """Fused HypTube forward: (N, C_in, H, W) -> (N, C_out, H, W)."""
    N, C, H, W = x.shape
    assert C == ht.in_channels, "input channel mismatch"
    q = ht.q
    C_out = ht.out_channels
    HW = H * W

    # Lane-dense layout: channels on sublanes, H*W on lanes.  Pure metadata
    # reshape -- no jnp.pad, no output slice, so x and y each cross HBM once.
    xf = x.reshape(N, C, HW)

    in_isz = xf.dtype.itemsize
    w_isz = ht.w1.dtype.itemsize
    exp_isz = jnp.dtype(ht.exp_dtype).itemsize if ht.exp_dtype is not None else 4
    # Per-lane VMEM working set: double-buffered I/O tiles + f32 encoder output
    # + p/s/d slices (worst case materialised) + exp temporaries + mixing
    # result + decoder-feed cast.  Weight/bias buffers subtracted from budget.
    per_lane = (2 * C * in_isz + 2 * C_out * in_isz
                + 4 * (3 * q)          # t
                + 4 * (3 * q)          # p / s / d
                + 2 * exp_isz * q      # e, e^-1
                + 4 * q                # c (f32 combine)
                + w_isz * q)           # c cast for the decoder matmul
    fixed = 2 * (ht.w1.size * w_isz + ht.w2.size * w_isz
                 + (ht.b1.size + ht.b2.size) * 4)
    budget = max(_VMEM_BUDGET_BYTES - fixed, 2 * 1024 * 1024)

    T = _pick_hw_tile(HW, N, per_lane, budget)
    grid = (N, pl.cdiv(HW, T))

    kernel = functools.partial(_tube_kernel, q=q, exp_dtype=ht.exp_dtype)
    y = pl.pallas_call(
        kernel,
        out_shape=jax.ShapeDtypeStruct((N, C_out, HW), x.dtype),
        grid=grid,
        in_specs=[
            pl.BlockSpec((1, C, T), lambda n, s: (n, 0, s)),
            # weights / biases: constant block index -> fetched once, VMEM-resident
            pl.BlockSpec((3 * q, C), lambda n, s: (0, 0)),
            pl.BlockSpec((3 * q, 1), lambda n, s: (0, 0)),
            pl.BlockSpec((C_out, q), lambda n, s: (0, 0)),
            pl.BlockSpec((C_out, 1), lambda n, s: (0, 0)),
        ],
        out_specs=pl.BlockSpec((1, C_out, T), lambda n, s: (n, 0, s)),
        compiler_params=pltpu.CompilerParams(
            dimension_semantics=("parallel", "parallel"),
            vmem_limit_bytes=_VMEM_LIMIT_BYTES),
    )(xf, ht.w1, ht.b1, ht.w2, ht.b2)

    return y.reshape(N, C_out, H, W)


# ------------------------------ module wrappers ------------------------------

class HypTubePallas:
    """HypTube(in, hidden, out, encoder=Linear, decoder=Linear) surrogate."""

    def __init__(self, in_channels, hidden_channels, out_channels, key=None,
                 compute_dtype=jnp.float32):
        self.in_channels = in_channels
        self.hidden_channels = hidden_channels
        self.out_channels = out_channels
        self.compute_dtype = jnp.dtype(compute_dtype)
        self.exp_dtype = (None if self.compute_dtype == jnp.dtype(jnp.float32)
                          else self.compute_dtype)

        h = hidden_channels
        # Pad the TOTAL 2h mixing rows (not each h-group) to a multiple of 8:
        # exps/VPU mixing run over q = ceil(2h/8)*8 rows instead of
        # 2*ceil(h/8)*8 (e.g. 24 vs 32 rows for h=10).  Group boundaries inside
        # [0, 2h) need no sublane alignment because the kernel never slices
        # them: the decoder matmul contracts over the whole q-row block with
        # zero weight on padded rows.
        q = -(-(2 * h) // 8) * 8
        self.q = q

        key = jax.random.PRNGKey(0) if key is None else key
        k1, k2, k3, k4 = jax.random.split(key, 4)

        # Raw parameters, PyTorch nn.Linear-style init (kept in f32 for the reference).
        bound1 = 1.0 / math.sqrt(in_channels)
        w1 = jax.random.uniform(k1, (4, h, in_channels), jnp.float32, -bound1, bound1)
        b1 = jax.random.uniform(k2, (4, h), jnp.float32, -bound1, bound1)
        bound2 = 1.0 / math.sqrt(2 * h)
        w2 = jax.random.uniform(k3, (out_channels, 2, h), jnp.float32, -bound2, bound2)
        b2 = jax.random.uniform(k4, (out_channels,), jnp.float32, -bound2, bound2)
        self.w1_raw, self.b1_raw, self.w2_raw, self.b2_raw = w1, b1, w2, b2

        # Fold the (u+v)/(u-v) rewrite and the sign flip into the encoder
        # parameters, so the kernel's mixing is just c = s*e^p + d*e^-p.
        w_theta, w_gamma, w_u, w_v = w1[0], w1[1], w1[2], w1[3]
        b_theta, b_gamma, b_u, b_v = b1[0], b1[1], b1[2], b1[3]
        ws, bs = w_u + w_v, b_u + b_v
        wd, bd = w_u - w_v, b_u - b_v

        w1p = jnp.zeros((3 * q, in_channels), jnp.float32)
        w1p = (w1p.at[0:h].set(w_theta).at[h:2 * h].set(w_gamma)
                   .at[q:q + h].set(ws).at[q + h:q + 2 * h].set(ws)
                   .at[2 * q:2 * q + h].set(wd).at[2 * q + h:2 * q + 2 * h].set(-wd))
        b1p = jnp.zeros((3 * q,), jnp.float32)
        b1p = (b1p.at[0:h].set(b_theta).at[h:2 * h].set(b_gamma)
                   .at[q:q + h].set(bs).at[q + h:q + 2 * h].set(bs)
                   .at[2 * q:2 * q + h].set(bd).at[2 * q + h:2 * q + 2 * h].set(-bd))

        # Decoder: single (C_out, q) matmul over the stacked [2a; 2b] block,
        # with the 0.5 from cosh/sinh folded into the weights.
        w2p = jnp.zeros((out_channels, q), jnp.float32)
        w2p = w2p.at[:, 0:h].set(0.5 * w2[:, 0]).at[:, h:2 * h].set(0.5 * w2[:, 1])

        # Weights pre-cast ONCE here (no per-step .astype of weights in-kernel);
        # biases stay f32 and are added after the f32-accumulated matmuls.
        self.w1 = w1p.astype(self.compute_dtype)
        self.b1 = b1p.reshape(3 * q, 1)
        self.w2 = w2p.astype(self.compute_dtype)
        self.b2 = b2.reshape(out_channels, 1)

    def __call__(self, x):
        return hyptube_forward(x, self)


class TubePallas:
    """Mirror of leibniz Tube: tube = HypTube(in, in+out, out, Linear, Linear)."""

    def __init__(self, in_channels, out_channels, key=None, compute_dtype=jnp.float32):
        self.in_channels = in_channels
        self.out_channels = out_channels
        self.tube = HypTubePallas(in_channels, in_channels + out_channels,
                                  out_channels, key=key, compute_dtype=compute_dtype)

    def __call__(self, x):
        return self.tube(x)


# -------------------------------- reference ----------------------------------

def reference_forward(x, tube_module):
    """Pure-JAX reference built from the raw (unpacked, f32) parameters."""
    ht = tube_module.tube
    N, C, H, W = x.shape
    hi = jax.lax.Precision.HIGHEST
    xf = x.reshape(N, C, H * W).astype(jnp.float32)
    w1, b1 = ht.w1_raw, ht.b1_raw          # (4, h, C), (4, h)
    w2, b2 = ht.w2_raw, ht.b2_raw          # (C_out, 2, h), (C_out,)

    def lin(w, b):
        return jnp.einsum('hc,ncl->nhl', w, xf, precision=hi) + b[None, :, None]

    theta, gamma, u, v = (lin(w1[i], b1[i]) for i in range(4))
    a = u * jnp.cosh(theta) + v * jnp.sinh(theta)
    b = u * jnp.sinh(gamma) + v * jnp.cosh(gamma)
    y = (jnp.einsum('oh,nhl->nol', w2[:, 0], a, precision=hi)
         + jnp.einsum('oh,nhl->nol', w2[:, 1], b, precision=hi)
         + b2[None, :, None])
    return y.reshape(N, ht.out_channels, H, W)


# ----------------------------------- main -------------------------------------

if __name__ == "__main__":
    key = jax.random.PRNGKey(0)
    kx, k1, k2, k3 = jax.random.split(key, 4)
    x = jax.random.normal(kx, (2, 4, 16, 16), jnp.float32)

    # Case 1: in == out (hidden = 8, q = 16); HW is a clean 128-multiple.
    t44 = TubePallas(4, 4, key=k1)
    y1 = jax.block_until_ready(t44(x))
    r1 = reference_forward(x, t44)
    assert y1.shape == (2, 4, 16, 16), "shape mismatch (4,4)"
    assert jnp.allclose(y1, r1, rtol=1e-4, atol=1e-4), "Tube(4,4) mismatch"

    # Case 2: in != out (hidden = 10, q = 24; exercises odd hidden packing).
    t46 = TubePallas(4, 6, key=k2)
    y2 = jax.block_until_ready(t46(x))
    r2 = reference_forward(x, t46)
    assert y2.shape == (2, 6, 16, 16), "shape mismatch (4,6)"
    assert jnp.allclose(y2, r2, rtol=1e-4, atol=1e-4), "Tube(4,6) mismatch"

    # Case 3: ragged spatial size (HW % 128 != 0) with batch 1: exercises the
    # masked tail block and the >=2-spatial-tiles rule (v7x dual-TC).
    xr = jax.random.normal(k3, (1, 4, 13, 15), jnp.float32)
    y3 = jax.block_until_ready(t46(xr))
    r3 = reference_forward(xr, t46)
    assert y3.shape == (1, 6, 13, 15), "shape mismatch (ragged)"
    assert jnp.allclose(y3, r3, rtol=1e-4, atol=1e-4), "ragged Tube(4,6) mismatch"

    # Case 4: bf16 weights/activations/exps (HBM-traffic + EUP fast path),
    # f32 accumulation; checked against the f32 reference at bf16 scale.
    t44b = TubePallas(4, 4, key=k1, compute_dtype=jnp.bfloat16)
    xb = x.astype(jnp.bfloat16)
    y4 = jax.block_until_ready(t44b(xb))
    r4 = reference_forward(xb.astype(jnp.float32), t44b)
    assert y4.shape == (2, 4, 16, 16), "shape mismatch (bf16 path)"
    rel = jnp.max(jnp.abs(y4.astype(jnp.float32) - r4)) / (jnp.max(jnp.abs(r4)) + 1e-6)
    assert bool(rel < 1e-1), f"bf16 path error too large: {rel}"

    print("KERNEL_OK")
</pallas_src>

<mosaic_0001>
module attributes {stable_mosaic.version = 11 : i64} {
  func.func @_tube_kernel(%arg0: i32, %arg1: i32, %arg2: memref<1x4x256xf32, #tpu.memory_space<vmem>>, %arg3: memref<48x4xf32, #tpu.memory_space<vmem>>, %arg4: memref<48x1xf32, #tpu.memory_space<vmem>>, %arg5: memref<4x16xf32, #tpu.memory_space<vmem>>, %arg6: memref<4x1xf32, #tpu.memory_space<vmem>>, %arg7: memref<1x4x256xf32, #tpu.memory_space<vmem>>) attributes {dimension_semantics = [#tpu.dimension_semantics<parallel>, #tpu.dimension_semantics<parallel>], iteration_bounds = array<i64: 2, 1>, scalar_prefetch = 0 : i64, scratch_operands = 0 : i64, tpu.core_type = #tpu.core_type<tc>, window_params = [{transform_indices = @transform_0, window_bounds = array<i64: 1, 4, 256>}, {pipeline_mode = #tpu.pipeline_mode<synchronous>, transform_indices = @transform_1, window_bounds = array<i64: 48, 4>}, {pipeline_mode = #tpu.pipeline_mode<synchronous>, transform_indices = @transform_2, window_bounds = array<i64: 48, 1>}, {pipeline_mode = #tpu.pipeline_mode<synchronous>, transform_indices = @transform_3, window_bounds = array<i64: 4, 16>}, {pipeline_mode = #tpu.pipeline_mode<synchronous>, transform_indices = @transform_4, window_bounds = array<i64: 4, 1>}, {transform_indices = @transform_5, window_bounds = array<i64: 1, 4, 256>}]} {
    %c0 = arith.constant 0 : index
    %c0_0 = arith.constant 0 : index
    %0 = vector.load %arg3[%c0, %c0_0] : memref<48x4xf32, #tpu.memory_space<vmem>>, vector<48x4xf32>
    %c0_1 = arith.constant 0 : index
    %c0_2 = arith.constant 0 : index
    %c0_3 = arith.constant 0 : index
    %1 = vector.load %arg2[%c0_1, %c0_2, %c0_3] : memref<1x4x256xf32, #tpu.memory_space<vmem>>, vector<1x4x256xf32>
    %2 = vector.shape_cast %1 : vector<1x4x256xf32> to vector<4x256xf32>
    %cst = arith.constant dense<0.000000e+00> : vector<48x256xf32>
    %3 = tpu.matmul %0, %2, %cst {dimension_numbers = #tpu.dot_dimension_numbers<[1], [0], [0], [1], [0, 0, 1, 1], [], []>} : vector<48x4xf32>, vector<4x256xf32>, vector<48x256xf32> -> vector<48x256xf32>
    %c0_4 = arith.constant 0 : index
    %c0_5 = arith.constant 0 : index
    %4 = vector.load %arg4[%c0_4, %c0_5] : memref<48x1xf32, #tpu.memory_space<vmem>>, vector<48x1xf32>
    %5 = vector.broadcast %4 : vector<48x1xf32> to vector<48x256xf32>
    %6 = arith.addf %3, %5 : vector<48x256xf32>
    %7 = vector.extract_strided_slice %6 {offsets = [0, 0], sizes = [16, 256], strides = [1, 1]} : vector<48x256xf32> to vector<16x256xf32>
    %8 = vector.extract_strided_slice %6 {offsets = [16, 0], sizes = [16, 256], strides = [1, 1]} : vector<48x256xf32> to vector<16x256xf32>
    %9 = vector.extract_strided_slice %6 {offsets = [32, 0], sizes = [16, 256], strides = [1, 1]} : vector<48x256xf32> to vector<16x256xf32>
    %10 = math.exp %7 : vector<16x256xf32>
    %cst_6 = arith.constant 0.000000e+00 : f32
    %11 = vector.broadcast %cst_6 : f32 to vector<16x256xf32>
    %12 = arith.subf %11, %7 : vector<16x256xf32>
    %13 = math.exp %12 : vector<16x256xf32>
    %14 = arith.mulf %8, %10 : vector<16x256xf32>
    %15 = arith.mulf %9, %13 : vector<16x256xf32>
    %16 = arith.addf %14, %15 : vector<16x256xf32>
    %c0_7 = arith.constant 0 : index
    %c0_8 = arith.constant 0 : index
    %17 = vector.load %arg5[%c0_7, %c0_8] : memref<4x16xf32, #tpu.memory_space<vmem>>, vector<4x16xf32>
    %cst_9 = arith.constant dense<0.000000e+00> : vector<4x256xf32>
    %18 = tpu.matmul %17, %16, %cst_9 {dimension_numbers = #tpu.dot_dimension_numbers<[1], [0], [0], [1], [0, 0, 1, 1], [], []>} : vector<4x16xf32>, vector<16x256xf32>, vector<4x256xf32> -> vector<4x256xf32>
    %c0_10 = arith.constant 0 : index
    %c0_11 = arith.constant 0 : index
    %19 = vector.load %arg6[%c0_10, %c0_11] : memref<4x1xf32, #tpu.memory_space<vmem>>, vector<4x1xf32>
    %20 = vector.broadcast %19 : vector<4x1xf32> to vector<4x256xf32>
    %21 = arith.addf %18, %20 : vector<4x256xf32>
    %c0_12 = arith.constant 0 : index
    %c0_13 = arith.constant 0 : index
    %c0_14 = arith.constant 0 : index
    %22 = vector.load %arg7[%c0_12, %c0_13, %c0_14] : memref<1x4x256xf32, #tpu.memory_space<vmem>>, vector<1x4x256xf32>
    %23 = vector.shape_cast %22 : vector<1x4x256xf32> to vector<4x256xf32>
    %24 = vector.shape_cast %21 : vector<4x256xf32> to vector<1x4x256xf32>
    tpu.vector_store %arg7[%c0_12, %c0_13, %c0_14], %24 {strides = array<i32>} : memref<1x4x256xf32, #tpu.memory_space<vmem>>, vector<1x4x256xf32>,
    return
  }
  func.func @transform_0(%arg0: i32, %arg1: i32) -> (i32, i32, i32) {
    %c0_i32 = arith.constant 0 : i32
    %c0_i32_0 = arith.constant 0 : i32
    return %arg0, %c0_i32, %arg1 : i32, i32, i32
  }
  func.func @transform_1(%arg0: i32, %arg1: i32) -> (i32, i32) {
    %c0_i32 = arith.constant 0 : i32
    %c0_i32_0 = arith.constant 0 : i32
    %c0_i32_1 = arith.constant 0 : i32
    return %c0_i32, %c0_i32_0 : i32, i32
  }
  func.func @transform_2(%arg0: i32, %arg1: i32) -> (i32, i32) {
    %c0_i32 = arith.constant 0 : i32
    %c0_i32_0 = arith.constant 0 : i32
    %c0_i32_1 = arith.constant 0 : i32
    return %c0_i32, %c0_i32_0 : i32, i32
  }
  func.func @transform_3(%arg0: i32, %arg1: i32) -> (i32, i32) {
    %c0_i32 = arith.constant 0 : i32
    %c0_i32_0 = arith.constant 0 : i32
    %c0_i32_1 = arith.constant 0 : i32
    return %c0_i32, %c0_i32_0 : i32, i32
  }
  func.func @transform_4(%arg0: i32, %arg1: i32) -> (i32, i32) {
    %c0_i32 = arith.constant 0 : i32
    %c0_i32_0 = arith.constant 0 : i32
    %c0_i32_1 = arith.constant 0 : i32
    return %c0_i32, %c0_i32_0 : i32, i32
  }
  func.func @transform_5(%arg0: i32, %arg1: i32) -> (i32, i32, i32) {
    %c0_i32 = arith.constant 0 : i32
    %c0_i32_0 = arith.constant 0 : i32
    return %arg0, %c0_i32, %arg1 : i32, i32, i32
  }
}

</mosaic_0001>

<llo_original>
// kernel: tpu_custom_call.1
$region0: #{tpu_custom_call.1}
  #allocation0 [shape = 'u32[]', space=smem, size = 0x4, offset = 0x4, fixed_abs, tag = 'smem constant byte address 0x4 - core index']
  #allocation1 [shape = 'u32[144,128]{1,0:T(1,128)}', space=vmem, size = 0x12000, scoped, tag = 'internal scratch']
  %s0 = inlined_call_operand.vmem [shape: f32[2,4,256], index: 0, kind: input, shape index: {}]
  %s1 = inlined_call_operand.vmem [shape: f32[48,4], index: 1, kind: input, shape index: {}]
  %s2 = inlined_call_operand.vmem [shape: f32[48,1], index: 2, kind: input, shape index: {}]
  %s3 = inlined_call_operand.vmem [shape: f32[4,16], index: 3, kind: input, shape index: {}]
  %s4 = inlined_call_operand.vmem [shape: f32[4,1], index: 4, kind: input, shape index: {}]
  %s5 = inlined_call_operand.hbm [shape: f32[2,4,256], index: 5, kind: output, shape index: {}]
  %s6 = sld [smem:[#allocation0]]
  $region53: #{tpu_custom_call.1} parent=0
    _
  %s8 = ssub.s32 1, %s6
  %s9 = scalar_select 0, %s8, %s6
  $region1: #{tpu_custom_call.1} parent=0
    #allocation2 [shape = 'u8[8192]{0}', space=vmem, size = 0x2000, scoped, tag = 'output window, operand 0']
    #allocation3 [shape = 's32[2]{0}', space=sflag, size = 0x8, scoped, tag = 'scoped memory for tpu_custom_call.1']
    %10 = vsyncpa [#allocation3], 0
    %s11 = scalar_lea.sflag [#allocation3], 1
    %12 = vsyncpa %s11, 0
    loop: start=0, step=1, limit=4
    $region2: #{tpu_custom_call.1} parent=1 // loop_pre_header
      _
    $region3: #{tpu_custom_call.1} parent=1 // loop_header
      %s14 = sphi 0, %s18
      %p15 = scmp.ge.s32.totalorder %s14, 4
      %s21 = sphi 0, %s33
      %s22 = sphi 0, %s29
      %s23 = sphi 0, %s21
      %s24 = sphi 0, %s22
      %s25 = sphi 0, %s23
      %s26 = sphi 0, %s24
      %s38 = sphi 0, %s40
      %s41 = sphi 0, %s38
      %s42 = sphi 0, %s41
      %s58 = sphi 0, %s42
      %s62 = sphi 0, %s62
      %s64 = sphi 0, %s62
      %s65 = sphi 0, %s64
      %s79 = sphi 0, %s65
      %s83 = sphi 0, %s83
      %s85 = sphi 0, %s83
      %s86 = sphi 0, %s85
      %s100 = sphi 0, %s86
      %s104 = sphi 0, %s104
      %s106 = sphi 0, %s104
      %s107 = sphi 0, %s106
      %s121 = sphi 0, %s107
      %s125 = sphi 0, %s125
      %s127 = sphi 0, %s125
      %s128 = sphi 0, %s127
      %s142 = sphi 0, %s128
      %s150 = sphi 0, %s152
      %s153 = sphi 0, %s150
      %s154 = sphi 0, %s153
      %s170 = sphi 0, %s154
    $region4: #{tpu_custom_call.1} parent=1 // loop_header_branch
      %17 = sbr.rel (%p15) target = $region8
    $region5: #{tpu_custom_call.1} parent=1 // loop_body
      %s19 = ssub.s32 %s14, 1
      %s20 = ssub.s32 %s14, 2
      %s27 = sadd.s32 1, %s22
      %p28 = scmp.ge.s32.totalorder %s27, 1
      %s29 = scalar_select %p28, 0, %s27
      %s30 = sadd.s32 1, %s21
      %s31 = scalar_select %p28, %s30, %s21
      %p32 = scmp.ge.s32.totalorder %s31, 2
      %s33 = scalar_select %p32, 0, %s31
      %s34 = ssub.s32 %s21, %s33
      %s35 = ssub.s32 %s22, %s29
      %s36 = sor.u32 %s34, %s35
      %p37 = scmp.eq.s32.totalorder %s36, 0
      %s39 = sadd.s32 %s38, 1
      %s40 = scalar_select %p37, %s38, %s39
      %p43 = pneg %p37
      %p44 = scmp.eq.s32.totalorder %s14, 1
      %p45 = por %p43, %p44
      %p46 = scmp.ne.s32.totalorder %s38, %s41
      %p47 = scmp.eq.s32.totalorder %s14, 0
      %p48 = por %p46, %p47
      %p49 = scmp.ne.s32.totalorder %s38, %s41
      %p50 = scmp.eq.s32.totalorder %s19, 1
      %p51 = por %p49, %p50
      %p52 = scmp.ne.s32.totalorder %s41, %s42
      %p53 = scmp.eq.s32.totalorder %s19, 0
      %p54 = por %p52, %p53
      %p55 = scmp.ne.s32.totalorder %s41, %s42
      %p56 = scmp.eq.s32.totalorder %s20, 1
      %p57 = por %p55, %p56
      %p59 = scmp.ne.s32.totalorder %s42, %s58
      %p60 = scmp.eq.s32.totalorder %s20, 0
      %p61 = por %p59, %p60
      %s63 = sadd.s32 %s62, 1
      %p66 = scmp.eq.s32.totalorder %s14, 1
      %p67 = scmp.ne.s32.totalorder %s62, %s64
      %p68 = scmp.eq.s32.totalorder %s14, 0
      %p69 = por %p67, %p68
      %p70 = scmp.ne.s32.totalorder %s62, %s64
      %p71 = scmp.eq.s32.totalorder %s19, 1
      %p72 = por %p70, %p71
      %p73 = scmp.ne.s32.totalorder %s64, %s65
      %p74 = scmp.eq.s32.totalorder %s19, 0
      %p75 = por %p73, %p74
      %p76 = scmp.ne.s32.totalorder %s64, %s65
      %p77 = scmp.eq.s32.totalorder %s20, 1
      %p78 = por %p76, %p77
      %p80 = scmp.ne.s32.totalorder %s65, %s79
      %p81 = scmp.eq.s32.totalorder %s20, 0
      %p82 = por %p80, %p81
      %s84 = sadd.s32 %s83, 1
      %p87 = scmp.eq.s32.totalorder %s14, 1
      %p88 = scmp.ne.s32.totalorder %s83, %s85
      %p89 = scmp.eq.s32.totalorder %s14, 0
      %p90 = por %p88, %p89
      %p91 = scmp.ne.s32.totalorder %s83, %s85
      %p92 = scmp.eq.s32.totalorder %s19, 1
      %p93 = por %p91, %p92
      %p94 = scmp.ne.s32.totalorder %s85, %s86
      %p95 = scmp.eq.s32.totalorder %s19, 0
      %p96 = por %p94, %p95
      %p97 = scmp.ne.s32.totalorder %s85, %s86
      %p98 = scmp.eq.s32.totalorder %s20, 1
      %p99 = por %p97, %p98
      %p101 = scmp.ne.s32.totalorder %s86, %s100
      %p102 = scmp.eq.s32.totalorder %s20, 0
      %p103 = por %p101, %p102
      %s105 = sadd.s32 %s104, 1
      %p108 = scmp.eq.s32.totalorder %s14, 1
      %p109 = scmp.ne.s32.totalorder %s104, %s106
      %p110 = scmp.eq.s32.totalorder %s14, 0
      %p111 = por %p109, %p110
      %p112 = scmp.ne.s32.totalorder %s104, %s106
      %p113 = scmp.eq.s32.totalorder %s19, 1
      %p114 = por %p112, %p113
      %p115 = scmp.ne.s32.totalorder %s106, %s107
      %p116 = scmp.eq.s32.totalorder %s19, 0
      %p117 = por %p115, %p116
      %p118 = scmp.ne.s32.totalorder %s106, %s107
      %p119 = scmp.eq.s32.totalorder %s20, 1
      %p120 = por %p118, %p119
      %p122 = scmp.ne.s32.totalorder %s107, %s121
      %p123 = scmp.eq.s32.totalorder %s20, 0
      %p124 = por %p122, %p123
      %s126 = sadd.s32 %s125, 1
      %p129 = scmp.eq.s32.totalorder %s14, 1
      %p130 = scmp.ne.s32.totalorder %s125, %s127
      %p131 = scmp.eq.s32.totalorder %s14, 0
      %p132 = por %p130, %p131
      %p133 = scmp.ne.s32.totalorder %s125, %s127
      %p134 = scmp.eq.s32.totalorder %s19, 1
      %p135 = por %p133, %p134
      %p136 = scmp.ne.s32.totalorder %s127, %s128
      %p137 = scmp.eq.s32.totalorder %s19, 0
      %p138 = por %p136, %p137
      %p139 = scmp.ne.s32.totalorder %s127, %s128
      %p140 = scmp.eq.s32.totalorder %s20, 1
      %p141 = por %p139, %p140
      %p143 = scmp.ne.s32.totalorder %s128, %s142
      %p144 = scmp.eq.s32.totalorder %s20, 0
      %p145 = por %p143, %p144
      %s146 = ssub.s32 %s21, %s33
      %s147 = ssub.s32 %s22, %s29
      %s148 = sor.u32 %s146, %s147
      %p149 = scmp.eq.s32.totalorder %s148, 0
      %s151 = sadd.s32 %s150, 1
      %s152 = scalar_select %p149, %s150, %s151
      %p155 = pneg %p149
      %p156 = scmp.eq.s32.totalorder %s14, 1
      %p157 = por %p155, %p156
      %p158 = scmp.ne.s32.totalorder %s150, %s153
      %p159 = scmp.eq.s32.totalorder %s14, 0
      %p160 = por %p158, %p159
      %p161 = scmp.ne.s32.totalorder %s150, %s153
      %p162 = scmp.eq.s32.totalorder %s19, 1
      %p163 = por %p161, %p162
      %p164 = scmp.ne.s32.totalorder %s153, %s154
      %p165 = scmp.eq.s32.totalorder %s19, 0
      %p166 = por %p164, %p165
      %p167 = scmp.ne.s32.totalorder %s153, %s154
      %p168 = scmp.eq.s32.totalorder %s20, 1
      %p169 = por %p167, %p168
      %p171 = scmp.ne.s32.totalorder %s154, %s170
      %p172 = scmp.eq.s32.totalorder %s20, 0
      %p173 = por %p171, %p172
      %p174 = scmp.le.s32.totalorder 1, %s14
      %p175 = scmp.lt.s32.totalorder %s14, 3
      %p176 = pnand %p174, %p175
      %p177 = pneg %p176
      // Predicated region
      $region9: #{tpu_custom_call.1} parent=5 // pred_check
        _
      $region10: #{tpu_custom_call.1} parent=5 // pred_check_branch
        %179 = sbr.rel (%p176) target = $region12
      $region11: #{tpu_custom_call.1} parent=5 // pred_region
        %s180 = ssub.s32 %s14, 1
        // Predicated region
        $region13: #{tpu_custom_call.1} parent=11 // pred_check
          %p181 = pneg %p75
        $region14: #{tpu_custom_call.1} parent=11 // pred_check_branch
          %183 = sbr.rel (%p181) target = $region16
        $region15: #{tpu_custom_call.1} parent=11 // pred_region
          _
        $region16: #{tpu_custom_call.1} parent=11 // pred_fallthru
          _
        // Predicated region
        $region17: #{tpu_custom_call.1} parent=11 // pred_check
          %p184 = pneg %p96
        $region18: #{tpu_custom_call.1} parent=11 // pred_check_branch
          %186 = sbr.rel (%p184) target = $region20
        $region19: #{tpu_custom_call.1} parent=11 // pred_region
          _
        $region20: #{tpu_custom_call.1} parent=11 // pred_fallthru
          _
        // Predicated region
        $region21: #{tpu_custom_call.1} parent=11 // pred_check
          %p187 = pneg %p117
        $region22: #{tpu_custom_call.1} parent=11 // pred_check_branch
          %189 = sbr.rel (%p187) target = $region24
        $region23: #{tpu_custom_call.1} parent=11 // pred_region
          _
        $region24: #{tpu_custom_call.1} parent=11 // pred_fallthru
          _
        // Predicated region
        $region25: #{tpu_custom_call.1} parent=11 // pred_check
          %p190 = pneg %p138
        $region26: #{tpu_custom_call.1} parent=11 // pred_check_branch
          %192 = sbr.rel (%p190) target = $region28
        $region27: #{tpu_custom_call.1} parent=11 // pred_region
          _
        $region28: #{tpu_custom_call.1} parent=11 // pred_fallthru
          _
      $region12: #{tpu_custom_call.1} parent=5 // pred_fallthru
        _
      %p193 = scmp.lt.s32.totalorder %s14, 2
      // Predicated region
      $region29: #{tpu_custom_call.1} parent=5 // pred_check
        %p194 = pneg %p193
      $region30: #{tpu_custom_call.1} parent=5 // pred_check_branch
        %196 = sbr.rel (%p194) target = $region32
      $region31: #{tpu_custom_call.1} parent=5 // pred_region
        // Predicated region
        $region33: #{tpu_custom_call.1} parent=31 // pred_check
          %p197 = pneg %p48
        $region34: #{tpu_custom_call.1} parent=31 // pred_check_branch
          %199 = sbr.rel (%p197) target = $region36
        $region35: #{tpu_custom_call.1} parent=31 // pred_region
          %s200 = smul.u32 2, %s22
          %p201 = scmp.lt.s32.totalorder %s21, 1
          %s202 = scalar_select %p201, %s21, 1
          %p203 = scmp.lt.s32.totalorder %s200, 1
          %s204 = scalar_select %p203, %s200, 1
          %s205 = smul.addr %s202, 2
          %s206 = sadd.s32 %s204, %s205
          %s207 = smul.addr %s206, 4
          %s208 = scalar_lea.vmem %s0, %s207
          %s209 = smul.u32 2, %s22
        $region36: #{tpu_custom_call.1} parent=31 // pred_fallthru
          _
      $region32: #{tpu_custom_call.1} parent=5 // pred_fallthru
        _
      %p210 = scmp.le.s32.totalorder 1, %s14
      %p211 = scmp.lt.s32.totalorder %s14, 3
      %p212 = pnand %p210, %p211
      %p213 = pneg %p212
      // Predicated region
      $region37: #{tpu_custom_call.1} parent=5 // pred_check
        _
      $region38: #{tpu_custom_call.1} parent=5 // pred_check_branch
        %215 = sbr.rel (%p212) target = $region40
      $region39: #{tpu_custom_call.1} parent=5 // pred_region
        %s216 = ssub.s32 %s14, 1
        %s217 = smul.u32 2, %s24
        %p218 = scmp.lt.s32.totalorder %s23, 1
        %s219 = scalar_select %p218, %s23, 1
        %p220 = scmp.lt.s32.totalorder %s217, 1
        %s221 = scalar_select %p220, %s217, 1
        %s222 = smul.addr %s219, 2
        %s223 = sadd.s32 %s221, %s222
        %s224 = smul.addr %s223, 4
        %s225 = scalar_lea.vmem %s0, %s224
        %p226 = pneg %p54
        %p227 = pneg %p51
        %p228 = pneg %p75
        %p229 = pneg %p72
        %p230 = pneg %p96
        %p231 = pneg %p93
        %p232 = pneg %p117
        %p233 = pneg %p114
        %p234 = pneg %p138
        %p235 = pneg %p135
        %p236 = pneg %p166
        %p237 = pneg %p163
        %s238 = sand.u32 %s153, 1
        %s239 = scalar_lea.sflag [#allocation3], %s238
        %s240 = sand.u32 %s153, 1
        %s241 = smul.addr %s240, 8
        %s242 = scalar_lea.vmem [#allocation2], %s241
        %s243 = smul.u32 2, %s24
        %p244 = scmp.lt.s32.totalorder %s23, 1
        %s245 = scalar_select %p244, %s23, 1
        %p246 = scmp.lt.s32.totalorder %s243, 1
        %s247 = scalar_select %p246, %s243, 1
        %s248 = smul.addr %s245, 2
        %s249 = sadd.s32 %s247, %s248
        %s250 = smul.addr %s249, 4
        %s251 = scalar_lea.vmem %s0, %s250
        %s252 = smul.u32 2, %s24
        %s253 = smul.u32 2, %s24
        %v254 = vld [vmem:[%s1] sm:$0xff]
        %v255 = vld [vmem:[%s1 + $0x8] sm:$0xff]
        %v256 = vld [vmem:[%s1 + $0x10] sm:$0xff]
        %v257 = vld [vmem:[%s1 + $0x18] sm:$0xff]
        %v258 = vld [vmem:[%s1 + $0x20] sm:$0xff]
        %v259 = vld [vmem:[%s1 + $0x28] sm:$0xff]
        %v260 = vld [vmem:[%s251] sm:$0xff]
        %v261 = vld [vmem:[%s2] sm:$0xff]
        %v262 = vld [vmem:[%s2 + $0x8] sm:$0xff]
        %v263 = vld [vmem:[%s2 + $0x10] sm:$0xff]
        %v264 = vld [vmem:[%s2 + $0x18] sm:$0xff]
        %v265 = vld [vmem:[%s2 + $0x20] sm:$0xff]
        %v266 = vld [vmem:[%s2 + $0x28] sm:$0xff]
        %268 = vset.pattern.permute.xlu0 0
        %269 = vperm.xlu0 %268, %v261
        %v270 = vpop.permute.xlu0 %269
        %273 = vset.pattern.permute.xlu0 0
        %274 = vperm.xlu0 %273, %v262
        %v275 = vpop.permute.xlu0 %274
        %278 = vset.pattern.permute.xlu0 0
        %279 = vperm.xlu0 %278, %v263
        %v280 = vpop.permute.xlu0 %279
        %283 = vset.pattern.permute.xlu0 0
        %284 = vperm.xlu0 %283, %v264
        %v285 = vpop.permute.xlu0 %284
        %288 = vset.pattern.permute.xlu0 0
        %289 = vperm.xlu0 %288, %v265
        %v290 = vpop.permute.xlu0 %289
        %293 = vset.pattern.permute.xlu0 0
        %294 = vperm.xlu0 %293, %v266
        %v295 = vpop.permute.xlu0 %294
        %v298 = vcombine.high %v260, %v260
        %vm299 = vcmask 31744
        %v301 = vsel %vm299, %v254, 0
        %v304 = vsel %vm299, %v255, 0
        %v307 = vsel %vm299, %v256, 0
        %v310 = vsel %vm299, %v257, 0
        %v313 = vsel %vm299, %v258, 0
        %v316 = vsel %vm299, %v259, 0
        %vm318 = vcmask 1043456
        %v319 = vsel %vm318, %v260, 0
        %v321 = vsel %vm318, %v298, 0
        %323 = vmatprep.subr.mxu0 %v321
        %324 = vmatpush1.msra.mxu0 %v319
        %325 = vmatprep.subr.mxu0 0.0
        %326 = vmatpush1.msra.mxu0 0.0
        %327 = vmatprep.subr.mxu0 0.0
        %328 = vmatpush1.msra.mxu0 0.0
        %329 = vmatprep.subr.mxu0 0.0
        %330 = vmatpush1.msra.mxu0 0.0
        %331 = vmatprep.subr.mxu0 0.0
        %332 = vmatpush1.msra.mxu0 0.0
        %333 = vmatprep.subr.mxu0 0.0
        %334 = vmatpush1.msra.mxu0 0.0
        %335 = vmatprep.subr.mxu0 0.0
        %336 = vmatpush1.msra.mxu0 0.0
        %337 = vmatprep.subr.mxu0 0.0
        %338 = vmatpush1.msra.mxu0 0.0
        %339 = vmatprep.subr.mxu0 0.0
        %340 = vmatpush1.msra.mxu0 0.0
        %341 = vmatprep.subr.mxu0 0.0
        %342 = vmatpush1.msra.mxu0 0.0
        %343 = vmatprep.subr.mxu0 0.0
        %344 = vmatpush1.msra.mxu0 0.0
        %345 = vmatprep.subr.mxu0 0.0
        %346 = vmatpush1.msra.mxu0 0.0
        %347 = vmatprep.subr.mxu0 0.0
        %348 = vmatpush1.msra.mxu0 0.0
        %349 = vmatprep.subr.mxu0 0.0
        %350 = vmatpush1.msra.mxu0 0.0
        %351 = vmatprep.subr.mxu0 0.0
        %352 = vmatpush1.msra.mxu0 0.0
        %353 = vmatprep.subr.mxu0 0.0
        %354 = vmatpush1.msra.mxu0 0.0
        %355 = vmatprep.subr.mxu0 0.0
        %356 = vmatpush1.msra.mxu0 0.0
        %357 = vmatprep.subr.mxu0 0.0
        %358 = vmatpush1.msra.mxu0 0.0
        %359 = vmatprep.subr.mxu0 0.0
        %360 = vmatpush1.msra.mxu0 0.0
        %361 = vmatprep.subr.mxu0 0.0
        %362 = vmatpush1.msra.mxu0 0.0
        %363 = vmatprep.subr.mxu0 0.0
        %364 = vmatpush1.msra.mxu0 0.0
        %365 = vmatprep.subr.mxu0 0.0
        %366 = vmatpush1.msra.mxu0 0.0
        %367 = vmatprep.subr.mxu0 0.0
        %368 = vmatpush1.msra.mxu0 0.0
        %369 = vmatprep.subr.mxu0 0.0
        %370 = vmatpush1.msra.mxu0 0.0
        %371 = vmatprep.subr.mxu0 0.0
        %372 = vmatpush1.msra.mxu0 0.0
        %373 = vmatprep.subr.mxu0 0.0
        %374 = vmatpush1.msra.mxu0 0.0
        %375 = vmatprep.subr.mxu0 0.0
        %376 = vmatpush1.msra.mxu0 0.0
        %377 = vmatprep.subr.mxu0 0.0
        %378 = vmatpush1.msra.mxu0 0.0
        %379 = vmatprep.subr.mxu0 0.0
        %380 = vmatpush1.msra.mxu0 0.0
        %381 = vmatprep.subr.mxu0 0.0
        %382 = vmatpush1.msra.mxu0 0.0
        %383 = vmatprep.subr.mxu0 0.0
        %384 = vmatpush1.msra.mxu0 0.0
        %385 = vmatprep.subr.mxu0 0.0
        %386 = vmatpush1.msra.mxu0 0.0
        %387 = vmatprep.mubr.f32.mxu0 0.0
        %388 = vmatmul.mubr.f32.gmra.mrb[0].mxu0 %v301
        %v389 = vpop.f32.mrb[0].mxu0
        %v390 = vadd.f32 %v270, %v389
        %v391 = vpop.f32.mrb[0].mxu0
        %v392 = vadd.f32 %v270, %v391
        %393 = vmatprep.mubr.f32.mxu0 0.0
        %394 = vmatmul.mubr.f32.gmra.mrb[0].mxu0 %v304
        %v395 = vpop.f32.mrb[0].mxu0
        %v396 = vadd.f32 %v275, %v395
        %v397 = vpop.f32.mrb[0].mxu0
        %v398 = vadd.f32 %v275, %v397
        %399 = vmatprep.mubr.f32.mxu0 0.0
        %400 = vmatmul.mubr.f32.gmra.mrb[0].mxu0 %v307
        %v401 = vpop.f32.mrb[0].mxu0
        %v402 = vadd.f32 %v280, %v401
        %v403 = vpop.f32.mrb[0].mxu0
        %v404 = vadd.f32 %v280, %v403
        %405 = vmatprep.mubr.f32.mxu0 0.0
        %406 = vmatmul.mubr.f32.gmra.mrb[0].mxu0 %v310
        %v407 = vpop.f32.mrb[0].mxu0
        %v408 = vadd.f32 %v285, %v407
        %v409 = vpop.f32.mrb[0].mxu0
        %v410 = vadd.f32 %v285, %v409
        %411 = vmatprep.mubr.f32.mxu0 0.0
        %412 = vmatmul.mubr.f32.gmra.mrb[0].mxu0 %v313
        %v413 = vpop.f32.mrb[0].mxu0
        %v414 = vadd.f32 %v290, %v413
        %v415 = vpop.f32.mrb[0].mxu0
        %v416 = vadd.f32 %v290, %v415
        %417 = vmatprep.mubr.f32.mxu0 0.0
        %418 = vmatmul.mubr.f32.gmra.mrb[0].mxu0 %v316
        %v419 = vpop.f32.mrb[0].mxu0
        %v420 = vadd.f32 %v295, %v419
        %v421 = vpop.f32.mrb[0].mxu0
        %v422 = vadd.f32 %v295, %v421
        %423 = vdwg.mxu0
        %v424 = vmul.f32 %v390, 1.442695
        %v425 = vpow.pop %v424
        %v426 = vmul.f32 %v392, 1.442695
        %v427 = vpow.pop %v426
        %v428 = vmul.f32 %v396, 1.442695
        %v429 = vpow.pop %v428
        %v430 = vmul.f32 %v398, 1.442695
        %v431 = vpow.pop %v430
        %v432 = vsub.f32 0.0, %v390
        %v433 = vsub.f32 0.0, %v392
        %v434 = vsub.f32 0.0, %v396
        %v435 = vsub.f32 0.0, %v398
        %v436 = vmul.f32 %v432, 1.442695
        %v437 = vpow.pop %v436
        %v438 = vmul.f32 %v433, 1.442695
        %v439 = vpow.pop %v438
        %v440 = vmul.f32 %v434, 1.442695
        %v441 = vpow.pop %v440
        %v442 = vmul.f32 %v435, 1.442695
        %v443 = vpow.pop %v442
        %v444 = vmul.f32 %v402, %v425
        %v445 = vmul.f32 %v404, %v427
        %v446 = vmul.f32 %v408, %v429
        %v447 = vmul.f32 %v410, %v431
        %v448 = vmul.f32 %v414, %v437
        %v449 = vmul.f32 %v416, %v439
        %v450 = vmul.f32 %v420, %v441
        %v451 = vmul.f32 %v422, %v443
        %v452 = vadd.f32 %v444, %v448
        %v453 = vadd.f32 %v445, %v449
        %v454 = vadd.f32 %v446, %v450
        %v455 = vadd.f32 %v447, %v451
        %v456 = vld [vmem:[%s3] sm:$0xf]
        %v457 = vld [vmem:[%s4] sm:$0xf]
        %459 = vset.pattern.permute.xlu0 0
        %460 = vperm.xlu0 %459, %v457
        %v461 = vpop.permute.xlu0 %460
        %vm463 = vcmask 130048
        %v465 = vsel %vm463, %v456, 0
        %467 = vmatprep.subr.mxu0 %v453
        %468 = vmatpush1.msra.mxu0 %v452
        %469 = vmatprep.subr.mxu0 %v455
        %470 = vmatpush1.msra.mxu0 %v454
        %471 = vmatprep.subr.mxu0 0.0
        %472 = vmatpush1.msra.mxu0 0.0
        %473 = vmatprep.subr.mxu0 0.0
        %474 = vmatpush1.msra.mxu0 0.0
        %475 = vmatprep.subr.mxu0 0.0
        %476 = vmatpush1.msra.mxu0 0.0
        %477 = vmatprep.subr.mxu0 0.0
        %478 = vmatpush1.msra.mxu0 0.0
        %479 = vmatprep.subr.mxu0 0.0
        %480 = vmatpush1.msra.mxu0 0.0
        %481 = vmatprep.subr.mxu0 0.0
        %482 = vmatpush1.msra.mxu0 0.0
        %483 = vmatprep.subr.mxu0 0.0
        %484 = vmatpush1.msra.mxu0 0.0
        %485 = vmatprep.subr.mxu0 0.0
        %486 = vmatpush1.msra.mxu0 0.0
        %487 = vmatprep.subr.mxu0 0.0
        %488 = vmatpush1.msra.mxu0 0.0
        %489 = vmatprep.subr.mxu0 0.0
        %490 = vmatpush1.msra.mxu0 0.0
        %491 = vmatprep.subr.mxu0 0.0
        %492 = vmatpush1.msra.mxu0 0.0
        %493 = vmatprep.subr.mxu0 0.0
        %494 = vmatpush1.msra.mxu0 0.0
        %495 = vmatprep.subr.mxu0 0.0
        %496 = vmatpush1.msra.mxu0 0.0
        %497 = vmatprep.subr.mxu0 0.0
        %498 = vmatpush1.msra.mxu0 0.0
        %499 = vmatprep.subr.mxu0 0.0
        %500 = vmatpush1.msra.mxu0 0.0
        %501 = vmatprep.subr.mxu0 0.0
        %502 = vmatpush1.msra.mxu0 0.0
        %503 = vmatprep.subr.mxu0 0.0
        %504 = vmatpush1.msra.mxu0 0.0
        %505 = vmatprep.subr.mxu0 0.0
        %506 = vmatpush1.msra.mxu0 0.0
        %507 = vmatprep.subr.mxu0 0.0
        %508 = vmatpush1.msra.mxu0 0.0
        %509 = vmatprep.subr.mxu0 0.0
        %510 = vmatpush1.msra.mxu0 0.0
        %511 = vmatprep.subr.mxu0 0.0
        %512 = vmatpush1.msra.mxu0 0.0
        %513 = vmatprep.subr.mxu0 0.0
        %514 = vmatpush1.msra.mxu0 0.0
        %515 = vmatprep.subr.mxu0 0.0
        %516 = vmatpush1.msra.mxu0 0.0
        %517 = vmatprep.subr.mxu0 0.0
        %518 = vmatpush1.msra.mxu0 0.0
        %519 = vmatprep.subr.mxu0 0.0
        %520 = vmatpush1.msra.mxu0 0.0
        %521 = vmatprep.subr.mxu0 0.0
        %522 = vmatpush1.msra.mxu0 0.0
        %523 = vmatprep.subr.mxu0 0.0
        %524 = vmatpush1.msra.mxu0 0.0
        %525 = vmatprep.subr.mxu0 0.0
        %526 = vmatpush1.msra.mxu0 0.0
        %527 = vmatprep.subr.mxu0 0.0
        %528 = vmatpush1.msra.mxu0 0.0
        %529 = vmatprep.subr.mxu0 0.0
        %530 = vmatpush1.msra.mxu0 0.0
        %531 = vmatprep.mubr.f32.mxu0 0.0
        %532 = vmatmul.mubr.f32.gmra.mrb[0].mxu0 %v465
        %v533 = vpop.f32.mrb[0].mxu0
        %v534 = vadd.f32 %v461, %v533
        %v535 = vpop.f32.mrb[0].mxu0
        %v536 = vadd.f32 %v461, %v535
        %537 = vdwg.mxu0
        %v540 = vcombine.low %v534, %v536
        %542 = vst [vmem:[%s242] sm:$0xff] %v540
        %s543 = sand.u32 %s153, 1
        %s544 = scalar_lea.sflag [#allocation3], %s543
        %s545 = sand.u32 %s153, 1
        %s546 = smul.addr %s545, 8
        %s547 = scalar_lea.vmem [#allocation2], %s546
        // Predicated region
        $region41: #{tpu_custom_call.1} parent=39 // pred_check
          %p548 = pneg %p163
        $region42: #{tpu_custom_call.1} parent=39 // pred_check_branch
          %550 = sbr.rel (%p548) target = $region44
        $region43: #{tpu_custom_call.1} parent=39 // pred_region
          %s551 = smul.u32 2, %s24
          %s553 = ssub.s32 128, 128
          %554 = vsyncadd %s544, %s553
          %s555 = smul.addr %s23, 2
          %s556 = sadd.s32 %s551, %s555
          %s557 = smul.addr %s556, 64
          %s558 = scalar_lea.hbm %s5, %s557
          %s560 = sshll.u32 %s547, 4
          %s561 = int_to_ptr.vmem [resolvable:$true] %s560
          %563 = dma.vmem_to_hbm [thread:$0]  %s561, 128, %s558, %s544
        $region44: #{tpu_custom_call.1} parent=39 // pred_fallthru
          _
      $region40: #{tpu_custom_call.1} parent=5 // pred_fallthru
        _
      %p564 = scmp.le.s32.totalorder 2, %s14
      // Predicated region
      $region45: #{tpu_custom_call.1} parent=5 // pred_check
        %p565 = pneg %p564
      $region46: #{tpu_custom_call.1} parent=5 // pred_check_branch
        %567 = sbr.rel (%p565) target = $region48
      $region47: #{tpu_custom_call.1} parent=5 // pred_region
        %s568 = ssub.s32 %s14, 2
        // Predicated region
        $region49: #{tpu_custom_call.1} parent=47 // pred_check
          %p569 = pneg %p169
        $region50: #{tpu_custom_call.1} parent=47 // pred_check_branch
          %571 = sbr.rel (%p569) target = $region52
        $region51: #{tpu_custom_call.1} parent=47 // pred_region
          %s572 = sand.u32 %s154, 1
          %s573 = scalar_lea.sflag [#allocation3], %s572
          %s574 = sand.u32 %s154, 1
          %s575 = smul.addr %s574, 8
          %s576 = scalar_lea.vmem [#allocation2], %s575
          %577 = dma.done %s573, 128
        $region52: #{tpu_custom_call.1} parent=47 // pred_fallthru
          _
      $region48: #{tpu_custom_call.1} parent=5 // pred_fallthru
        _
    $region6: #{tpu_custom_call.1} parent=1 // loop_footer
      %s18 = sadd.s32 1, %s14
    $region7: #{tpu_custom_call.1} parent=1 // loop_footer_branch
      %13 = sbr.rel target = $region3
    $region8: #{tpu_custom_call.1} parent=1 // loop_exit
      _
    %578 = vsyncpa [#allocation3], 1
    %s579 = scalar_lea.sflag [#allocation3], 1
    %580 = vsyncpa %s579, 1

</llo_original>
